<compile_context>
chip_gen: v7x
topology: tpu7x:2x2x1
jax: 0.10.0
libtpu: 0.0.40
codegen_flags: <defaults>
</compile_context>

<pallas_src>
import functools

import jax
import jax.numpy as jnp
from jax import lax
from jax.experimental import pallas as pl
from jax.experimental.pallas import tpu as pltpu


def _round_up(x, m):
    return (x + m - 1) // m * m


def _focal_loss_kernel(logits_ref, targets_ref, out_ref, *,
                       alpha, gamma, gamma_int, use_int_pow):
    # logits_ref : (C, T)  classes on sublanes, batch columns on lanes.
    # targets_ref: (1, T)  small-int; negative marks padded / ragged columns.
    x = logits_ref[...].astype(jnp.float32)
    t = targets_ref[...].astype(jnp.int32)

    # Numerically stable softmax pieces over the (short) class / sublane axis.
    m = jnp.max(x, axis=0, keepdims=True)                        # (1, T)
    shifted = x - m                                              # (C, T)
    exp_shifted = jnp.exp(shifted)                               # (C, T)  EUP
    sumexp = jnp.sum(exp_shifted, axis=0, keepdims=True)         # (1, T)
    lse = jnp.log(sumexp)                                        # (1, T)  EUP

    # Target pick via select (no one-hot f32 cast, no extra multiply).
    cls = lax.broadcasted_iota(jnp.int32, x.shape, 0)            # (C, T)
    hit = cls == t
    picked = jnp.sum(jnp.where(hit, shifted, 0.0), axis=0, keepdims=True)
    picked_exp = jnp.sum(jnp.where(hit, exp_shifted, 0.0), axis=0, keepdims=True)

    ce = lse - picked                                            # (1, T), >= 0

    # pt = exp(-ce) without a second exp: pt = exp(picked) / sumexp.
    inv = pl.reciprocal(sumexp, approx=True)                     # EUP (cheap slot)
    inv = inv * (2.0 - sumexp * inv)                             # 1 Newton step (VPU)
    pt = picked_exp * inv

    d = jnp.maximum(1.0 - pt, 0.0)         # clamp: no NaN hazard from pow
    if use_int_pow:                        # VPU multiply chain (gamma integral)
        pw = jnp.ones_like(d)
        for _ in range(gamma_int):
            pw = pw * d
    else:                                  # safe: d >= 0
        pw = jnp.power(d, jnp.float32(gamma))
    focal = jnp.float32(alpha) * pw * ce

    # Padded / ragged-tail columns carry target -1 -> select them out.
    focal = jnp.where(t >= 0, focal, 0.0)                        # (1, T)

    # (1, 128) lane-vector partial: fold the T lanes onto sublanes and reduce
    # over sublanes only; the wrapper finishes with one tiny reduction.
    t_cols = focal.shape[-1]
    part = jnp.sum(focal.reshape(t_cols // 128, 128), axis=0, keepdims=True)
    out_ref[...] = part.reshape(out_ref.shape)


def focal_loss(logits, targets, *, alpha=1.0, gamma=2.0, reduction="mean"):
    """FocalLoss forward. logits: [N, C] float (any dtype), targets: [N] int."""
    if reduction == "none":
        # TODO(synk): per-sample ('none') output path not implemented; the
        # training script uses the module default reduction='mean'.
        raise NotImplementedError("reduction='none' is not implemented")

    n, c = logits.shape
    dtype_bytes = jnp.dtype(logits.dtype).itemsize

    # Narrow target dtype (HBM-bytes win, mostly on v5e).
    if c <= 32767:
        tgt_dtype = jnp.int16
    else:
        tgt_dtype = jnp.int32
    tgt_bytes = jnp.dtype(tgt_dtype).itemsize

    # Dtype-aware VMEM budget per batch column:
    #   double-buffered logits + double-buffered targets + f32 temporaries.
    n_ceil = _round_up(n, 128)
    per_col = 2 * c * dtype_bytes + 2 * tgt_bytes + (4 * c + 8) * 4
    budget = 20 * 1024 * 1024          # safe under v7x's 32 MiB scoped VMEM
    vmem_cols = max(128, budget // per_col // 128 * 128)
    tile_n = min(32 * 1024, vmem_cols, n_ceil)
    # Keep >= 2 grid steps for big batches so v7x's two TCs both get work.
    if n_ceil >= 2048 and tile_n >= n_ceil:
        tile_n = _round_up(n_ceil // 2, 128)
    g = pl.cdiv(n, tile_n)
    n_pad = g * tile_n

    # Layout plumbing only: classes -> sublanes, batch -> lanes.  The logits
    # are NOT padded (ragged last tile is masked in-kernel); only the tiny
    # target row is padded with -1.
    x_t = logits.T                               # (C, n)
    t = targets.astype(tgt_dtype)
    if n_pad != n:
        t = jnp.pad(t, (0, n_pad - n), constant_values=-1)
    t_row = t.reshape(1, n_pad)                  # (1, n_pad)

    gamma_f = float(gamma)
    gamma_int = int(gamma_f)
    use_int_pow = (float(gamma_int) == gamma_f) and (0 <= gamma_int <= 8)

    kernel = functools.partial(
        _focal_loss_kernel,
        alpha=float(alpha),
        gamma=gamma_f,
        gamma_int=gamma_int,
        use_int_pow=use_int_pow,
    )

    partials = pl.pallas_call(
        kernel,
        out_shape=jax.ShapeDtypeStruct((g, 1, 128), jnp.float32),
        grid_spec=pltpu.PrefetchScalarGridSpec(
            num_scalar_prefetch=0,
            grid=(g,),
            in_specs=[
                pl.BlockSpec((c, tile_n), lambda i: (0, i)),   # logits.T tile
                pl.BlockSpec((1, tile_n), lambda i: (0, i)),   # targets tile
            ],
            out_specs=pl.BlockSpec((1, 1, 128), lambda i: (i, 0, 0)),
        ),
        compiler_params=pltpu.CompilerParams(
            # Independent per-tile partials -> shard across v7x's 2 TCs.
            dimension_semantics=("parallel",),
            vmem_limit_bytes=32 * 1024 * 1024,
        ),
    )(x_t, t_row)

    total = jnp.sum(partials)                    # tiny final reduce in XLA
    if reduction == "sum":
        return total
    return total / jnp.float32(n)                # 'mean'


def _reference_focal_loss(logits, targets, alpha=1.0, gamma=2.0):
    log_probs = jax.nn.log_softmax(logits.astype(jnp.float32), axis=-1)
    ce = -jnp.take_along_axis(
        log_probs, targets[:, None].astype(jnp.int32), axis=-1)[:, 0]
    pt = jnp.exp(-ce)
    return jnp.mean(alpha * (1.0 - pt) ** gamma * ce)


if __name__ == "__main__":
    key = jax.random.PRNGKey(0)
    k1, k2, k3, k4 = jax.random.split(key, 4)

    # Small shapes matching the sentiment-classification use:
    # a batch of logits over a handful of classes.
    N, C = 8, 4
    logits = jax.random.normal(k1, (N, C), dtype=jnp.float32)
    targets = jax.random.randint(k2, (N,), 0, C, dtype=jnp.int32)

    out = jax.block_until_ready(focal_loss(logits, targets, alpha=1.0, gamma=2.0))
    ref = _reference_focal_loss(logits, targets, alpha=1.0, gamma=2.0)
    assert jnp.allclose(out, ref, rtol=1e-4, atol=1e-6), (out, ref)

    # Second check: batch not a multiple of the tile + bf16 logits
    # (exercises the ragged-tile mask and the native-dtype input path).
    N2, C2 = 200, 3
    logits2 = jax.random.normal(k3, (N2, C2), dtype=jnp.bfloat16)
    targets2 = jax.random.randint(k4, (N2,), 0, C2, dtype=jnp.int32)
    out2 = jax.block_until_ready(focal_loss(logits2, targets2, alpha=0.5, gamma=2.0))
    ref2 = _reference_focal_loss(logits2, targets2, alpha=0.5, gamma=2.0)
    assert jnp.allclose(out2, ref2, rtol=2e-4, atol=1e-5), (out2, ref2)

    print("KERNEL_OK")
</pallas_src>

<mosaic_0001>
module attributes {stable_mosaic.version = 11 : i64} {
  func.func @_focal_loss_kernel(%arg0: i32, %arg1: memref<4x128xf32, #tpu.memory_space<vmem>>, %arg2: memref<1x128xi16, #tpu.memory_space<vmem>>, %arg3: memref<1x1x128xf32, #tpu.memory_space<vmem>>) attributes {dimension_semantics = [#tpu.dimension_semantics<parallel>], iteration_bounds = array<i64: 1>, scalar_prefetch = 0 : i64, scratch_operands = 0 : i64, tpu.core_type = #tpu.core_type<tc>, window_params = [{transform_indices = @transform_0, window_bounds = array<i64: 4, 128>}, {transform_indices = @transform_1, window_bounds = array<i64: 1, 128>}, {transform_indices = @transform_2, window_bounds = array<i64: 1, 1, 128>}]} {
    %c0 = arith.constant 0 : index
    %c0_0 = arith.constant 0 : index
    %0 = vector.load %arg1[%c0, %c0_0] : memref<4x128xf32, #tpu.memory_space<vmem>>, vector<4x128xf32>
    %c0_1 = arith.constant 0 : index
    %c0_2 = arith.constant 0 : index
    %1 = vector.load %arg2[%c0_1, %c0_2] : memref<1x128xi16, #tpu.memory_space<vmem>>, vector<1x128xi16>
    %2 = arith.extsi %1 : vector<1x128xi16> to vector<1x128xi32>
    %cst = arith.constant dense<0xFF800000> : vector<128xf32>
    %3 = vector.multi_reduction <maximumf>, %0, %cst [0] : vector<4x128xf32> to vector<128xf32>
    %4 = vector.shape_cast %3 : vector<128xf32> to vector<1x128xf32>
    %5 = vector.broadcast %4 : vector<1x128xf32> to vector<4x128xf32>
    %6 = arith.subf %0, %5 : vector<4x128xf32>
    %7 = math.exp %6 : vector<4x128xf32>
    %cst_3 = arith.constant dense<0.000000e+00> : vector<128xf32>
    %8 = vector.multi_reduction <add>, %7, %cst_3 [0] : vector<4x128xf32> to vector<128xf32>
    %9 = vector.shape_cast %8 : vector<128xf32> to vector<1x128xf32>
    %10 = math.log %9 : vector<1x128xf32>
    %11 = tpu.iota {dimensions = array<i32: 0>} : vector<4x128xi32>
    %12 = vector.broadcast %2 : vector<1x128xi32> to vector<4x128xi32>
    %13 = arith.cmpi eq, %11, %12 : vector<4x128xi32>
    %cst_4 = arith.constant 0.000000e+00 : f32
    %14 = vector.broadcast %cst_4 : f32 to vector<4x128xf32>
    %15 = arith.select %13, %6, %14 : vector<4x128xi1>, vector<4x128xf32>
    %cst_5 = arith.constant dense<0.000000e+00> : vector<128xf32>
    %16 = vector.multi_reduction <add>, %15, %cst_5 [0] : vector<4x128xf32> to vector<128xf32>
    %17 = vector.shape_cast %16 : vector<128xf32> to vector<1x128xf32>
    %cst_6 = arith.constant 0.000000e+00 : f32
    %18 = vector.broadcast %cst_6 : f32 to vector<4x128xf32>
    %19 = arith.select %13, %7, %18 : vector<4x128xi1>, vector<4x128xf32>
    %cst_7 = arith.constant dense<0.000000e+00> : vector<128xf32>
    %20 = vector.multi_reduction <add>, %19, %cst_7 [0] : vector<4x128xf32> to vector<128xf32>
    %21 = vector.shape_cast %20 : vector<128xf32> to vector<1x128xf32>
    %22 = arith.subf %10, %17 : vector<1x128xf32>
    %23 = tpu.reciprocal %9 {approx = true} : vector<1x128xf32> -> vector<1x128xf32>
    %24 = arith.mulf %9, %23 : vector<1x128xf32>
    %cst_8 = arith.constant 2.000000e+00 : f32
    %25 = vector.broadcast %cst_8 : f32 to vector<1x128xf32>
    %26 = arith.subf %25, %24 : vector<1x128xf32>
    %27 = arith.mulf %23, %26 : vector<1x128xf32>
    %28 = arith.mulf %21, %27 : vector<1x128xf32>
    %cst_9 = arith.constant 1.000000e+00 : f32
    %29 = vector.broadcast %cst_9 : f32 to vector<1x128xf32>
    %30 = arith.subf %29, %28 : vector<1x128xf32>
    %cst_10 = arith.constant 0.000000e+00 : f32
    %31 = vector.broadcast %cst_10 : f32 to vector<1x128xf32>
    %32 = arith.maximumf %30, %31 : vector<1x128xf32>
    %cst_11 = arith.constant 1.000000e+00 : f32
    %33 = vector.broadcast %cst_11 : f32 to vector<1x128xf32>
    %34 = arith.mulf %33, %32 : vector<1x128xf32>
    %35 = arith.mulf %34, %32 : vector<1x128xf32>
    %cst_12 = arith.constant 1.000000e+00 : f32
    %36 = vector.broadcast %cst_12 : f32 to vector<1x128xf32>
    %37 = arith.mulf %36, %35 : vector<1x128xf32>
    %38 = arith.mulf %37, %22 : vector<1x128xf32>
    %c0_i32 = arith.constant 0 : i32
    %39 = vector.broadcast %c0_i32 : i32 to vector<1x128xi32>
    %40 = arith.cmpi sge, %2, %39 : vector<1x128xi32>
    %cst_13 = arith.constant 0.000000e+00 : f32
    %41 = vector.broadcast %cst_13 : f32 to vector<1x128xf32>
    %42 = arith.select %40, %38, %41 : vector<1x128xi1>, vector<1x128xf32>
    %cst_14 = arith.constant dense<0.000000e+00> : vector<128xf32>
    %43 = vector.multi_reduction <add>, %42, %cst_14 [0] : vector<1x128xf32> to vector<128xf32>
    %44 = vector.shape_cast %43 : vector<128xf32> to vector<1x128xf32>
    %45 = vector.shape_cast %44 : vector<1x128xf32> to vector<1x1x128xf32>
    %c0_15 = arith.constant 0 : index
    %c0_16 = arith.constant 0 : index
    %c0_17 = arith.constant 0 : index
    %46 = vector.load %arg3[%c0_15, %c0_16, %c0_17] : memref<1x1x128xf32, #tpu.memory_space<vmem>>, vector<1x1x128xf32>
    tpu.vector_store %arg3[%c0_15, %c0_16, %c0_17], %45 {strides = array<i32>} : memref<1x1x128xf32, #tpu.memory_space<vmem>>, vector<1x1x128xf32>,
    return
  }
  func.func @transform_0(%arg0: i32) -> (i32, i32) {
    %c0_i32 = arith.constant 0 : i32
    %c0_i32_0 = arith.constant 0 : i32
    return %c0_i32, %arg0 : i32, i32
  }
  func.func @transform_1(%arg0: i32) -> (i32, i32) {
    %c0_i32 = arith.constant 0 : i32
    %c0_i32_0 = arith.constant 0 : i32
    return %c0_i32, %arg0 : i32, i32
  }
  func.func @transform_2(%arg0: i32) -> (i32, i32, i32) {
    %c0_i32 = arith.constant 0 : i32
    %c0_i32_0 = arith.constant 0 : i32
    %c0_i32_1 = arith.constant 0 : i32
    return %arg0, %c0_i32, %c0_i32_0 : i32, i32, i32
  }
}

</mosaic_0001>

<llo_original>
// kernel: tpu_custom_call.1
$region0: #{tpu_custom_call.1}
  #allocation0 [shape = 'u32[]', space=smem, size = 0x4, offset = 0x4, fixed_abs, tag = 'smem constant byte address 0x4 - core index']
  #allocation1 [shape = 'u32[144,128]{1,0:T(1,128)}', space=vmem, size = 0x12000, scoped, tag = 'internal scratch']
  %s0 = inlined_call_operand.hbm [shape: f32[4,8], index: 0, kind: input, shape index: {}]
  %s1 = inlined_call_operand.vmem [shape: s16[1,128], index: 1, kind: input, shape index: {}]
  %s2 = inlined_call_operand.hbm [shape: f32[1,1,128], index: 2, kind: output, shape index: {}]
  %s3 = sld [smem:[#allocation0]]
  $region22: #{tpu_custom_call.1} parent=0
    _
  %s5 = ssub.s32 1, %s3
  %s6 = scalar_select 0, %s5, %s3
  $region1: #{tpu_custom_call.1} parent=0
    #allocation2 [shape = 'u8[2048]{0}', space=vmem, size = 0x800, scoped, tag = 'input window, operand 0, single buffered']
    #allocation3 [shape = 's32[1]{0}', space=sflag, size = 0x4, scoped, tag = 'scoped memory for tpu_custom_call.1']
    #allocation4 [shape = 's32[1]{0}', space=sflag, size = 0x4, scoped, tag = 'scoped memory for tpu_custom_call.1']
    #allocation5 [shape = 'u8[512]{0}', space=vmem, size = 0x400, scoped, tag = 'output window, operand 0, single buffered']
    %7 = vsyncpa [#allocation3], 0
    %8 = vsyncpa [#allocation4], 0
    // Predicated region
    $region2: #{tpu_custom_call.1} parent=1 // pred_check
      _
    $region3: #{tpu_custom_call.1} parent=1 // pred_check_branch
      %10 = sbr.rel (0) target = $region5
    $region4: #{tpu_custom_call.1} parent=1 // pred_region
      %s12 = ssub.s32 64, 64
      %13 = vsyncadd [#allocation3], %s12
      %s15 = sshll.u32 [#allocation2], 4
      %s16 = int_to_ptr.vmem [resolvable:$true] %s15
      %18 = dma.hbm_to_vmem [thread:$0]  %s0, 64, %s16, [#allocation3]
    $region5: #{tpu_custom_call.1} parent=1 // pred_fallthru
      _
    // Predicated region
    $region6: #{tpu_custom_call.1} parent=1 // pred_check
      _
    $region7: #{tpu_custom_call.1} parent=1 // pred_check_branch
      %20 = sbr.rel (0) target = $region9
    $region8: #{tpu_custom_call.1} parent=1 // pred_region
      _
    $region9: #{tpu_custom_call.1} parent=1 // pred_fallthru
      _
    // Predicated region
    $region10: #{tpu_custom_call.1} parent=1 // pred_check
      _
    $region11: #{tpu_custom_call.1} parent=1 // pred_check_branch
      %22 = sbr.rel (0) target = $region13
    $region12: #{tpu_custom_call.1} parent=1 // pred_region
      %23 = dma.done [#allocation3], 64
    $region13: #{tpu_custom_call.1} parent=1 // pred_fallthru
      _
    %v24 = vld [vmem:[#allocation2] sm:$0xf]
    %v25 = vld [vmem:[%s1] sm:$0x1]
    %v26 = vunpack.c.l.b16 %v25
    %vm27 = vcmask 1043456
    %v28 = vsel %vm27, %v24, -inf
    %v29 = vrot.slane %v28, 4
    %v30 = vmax.f32 %v28, %v29
    %v31 = vrot.slane %v30, 2
    %v32 = vmax.f32 %v30, %v31
    %v33 = vrot.slane %v32, 1
    %v34 = vmax.f32 %v32, %v33
    %v35 = vsub.f32 %v24, %v34
    %v36 = vmul.f32 %v35, 1.442695
    %v37 = vpow.pop %v36
    %v38 = vsel %vm27, %v37, 0.0
    %v39 = vrot.slane %v38, 4
    %v40 = vadd.f32 %v38, %v39
    %v41 = vrot.slane %v40, 2
    %v42 = vadd.f32 %v40, %v41
    %v43 = vrot.slane %v42, 1
    %v44 = vadd.f32 %v42, %v43
    %v45 = vlog2.pop %v44
    %v46 = vmul.f32 %v45, 0.6931472
    %v47 = vlaneseq
    %v48 = vshrl.u32 %v47, 7
    %v49 = vlaneseq
    %v50 = vshrl.u32 %v49, 7
    %v51 = vsub.s32 0, %v50
    %v52 = vrot.slane %v26, %v51
    %vm53 = vcmp.eq.s32.totalorder %v48, %v52
    %v54 = vsel %vm53, %v35, 0.0
    %v55 = vsel %vm27, %v54, 0.0
    %v56 = vrot.slane %v55, 4
    %v57 = vadd.f32 %v55, %v56
    %v58 = vrot.slane %v57, 2
    %v59 = vadd.f32 %v57, %v58
    %v60 = vrot.slane %v59, 1
    %v61 = vadd.f32 %v59, %v60
    %v62 = vsel %vm53, %v37, 0.0
    %v63 = vsel %vm27, %v62, 0.0
    %v64 = vrot.slane %v63, 4
    %v65 = vadd.f32 %v63, %v64
    %v66 = vrot.slane %v65, 2
    %v67 = vadd.f32 %v65, %v66
    %v68 = vrot.slane %v67, 1
    %v69 = vadd.f32 %v67, %v68
    %v70 = vsub.f32 %v46, %v61
    %v71 = vrcp.pop %v44
    %v72 = vmul.f32 %v44, %v71
    %v73 = vsub.f32 2.0, %v72
    %v74 = vmul.f32 %v71, %v73
    %v75 = vmul.f32 %v69, %v74
    %v76 = vsub.f32 1.0, %v75
    %v77 = vmax.f32 %v76, 0.0
    %v78 = vmul.f32 %v77, %v77
    %v79 = vmul.f32 %v78, %v70
    %vm80 = vcmp.ge.s32.totalorder %v26, 0
    %v81 = vsel %vm80, %v79, 0.0
    %v82 = vadd.f32 %v81, 0.0
    %83 = vst [vmem:[#allocation5] sm:$0x1] %v82
    // Predicated region
    $region14: #{tpu_custom_call.1} parent=1 // pred_check
      _
    $region15: #{tpu_custom_call.1} parent=1 // pred_check_branch
      %85 = sbr.rel (0) target = $region17
    $region16: #{tpu_custom_call.1} parent=1 // pred_region
      %s87 = ssub.s32 16, 16
      %88 = vsyncadd [#allocation4], %s87
      %s90 = sshll.u32 [#allocation5], 4
      %s91 = int_to_ptr.vmem [resolvable:$true] %s90
      %93 = dma.vmem_to_hbm [thread:$0]  %s91, 16, %s2, [#allocation4]
    $region17: #{tpu_custom_call.1} parent=1 // pred_fallthru
      _
    // Predicated region
    $region18: #{tpu_custom_call.1} parent=1 // pred_check
      _
    $region19: #{tpu_custom_call.1} parent=1 // pred_check_branch
      %95 = sbr.rel (0) target = $region21
    $region20: #{tpu_custom_call.1} parent=1 // pred_region
      %96 = dma.done [#allocation4], 16
    $region21: #{tpu_custom_call.1} parent=1 // pred_fallthru
      _
    %97 = vsyncpa [#allocation3], 1
    %98 = vsyncpa [#allocation4], 1

</llo_original>
